<compile_context>
chip_gen: v5e
topology: v5e:2x2
jax: 0.10.0
libtpu: 0.0.40
codegen_flags: <defaults>
</compile_context>

<pallas_src>
import jax
import jax.numpy as jnp
from jax.experimental import pallas as pl
from jax.experimental.pallas import tpu as pltpu


IN_FEATURES = 48 * 4 * 4   # 768
HIDDEN = 100               # logical hidden width (PyTorch)
HIDDEN_PAD = 128           # zero-padded to a full lane tile
NUM_CLASSES = 2
TILE_B = 2048              # batch tile; sweep 2048-4096 for very large B


def _round_up(n, m):
    return ((n + m - 1) // m) * m


def domain_classifier_kernel(x_ref, w1_ref, b1_ref, w2_ref, b2_ref, out_ref):
    # GradReverse.grad_reverse(x, constant) is identity in the forward pass.
    # In-kernel cast to the matmul dtype (VPU work hidden under the x DMA);
    # the HBM stream stays in x's storage dtype.
    xm = x_ref[...].astype(w1_ref.dtype)                       # (tb, 768)

    # fc1 + ReLU. HIDDEN padded 100->128: padded lanes are exactly 0 after ReLU.
    h = jnp.dot(xm, w1_ref[...], preferred_element_type=jnp.float32)
    h = jnp.maximum(h + b1_ref[...], 0.0)                      # (tb, 128) f32

    # fc2 + 2-class log_softmax via the logit difference d = l1 - l0.
    w2 = w2_ref[...]                                           # (128, 2) f32
    b2 = b2_ref[...]                                           # (1, 2)   f32
    w2d = w2[:, 1:2] - w2[:, 0:1]                              # (128, 1), padded rows 0
    d = jnp.dot(h, w2d, preferred_element_type=jnp.float32)    # (tb, 1)
    d = d + (b2[:, 1:2] - b2[:, 0:1])

    # Numerically stable softplus(d) = max(d,0) + log(1 + exp(-|d|)).
    sp = jnp.maximum(d, 0.0) + jnp.log(1.0 + jnp.exp(-jnp.abs(d)))
    out_ref[:, 0:1] = (-sp).astype(out_ref.dtype)              # log p(class 0)
    out_ref[:, 1:2] = (d - sp).astype(out_ref.dtype)           # log p(class 1)


def domain_classifier_forward(x, w1, b1, w2, b2, constant=1.0, *,
                              tile_b=TILE_B, matmul_dtype=jnp.bfloat16):
    """Forward pass of DomainClassifier.

    x : (B, 768) or (B, 48, 4, 4); flattened like torch's view(B, -1).
    w1: (768, 128)  b1: (1, 128)   -- transposed vs torch, zero-padded 100->128
    w2: (128, 2)    b2: (1, 2)     -- w2 zero-padded 100->128 along rows
    `constant` only scales gradients in GradReverse's backward -> unused here.
    matmul_dtype: bf16 default (f32 accumulation); pass jnp.float32 for a
    full-precision debug/reference path.
    """
    del constant
    if x.ndim > 2:
        x = x.reshape(x.shape[0], -1)
    B = x.shape[0]
    assert x.shape[1] == IN_FEATURES

    # bf16 packs 2 rows per sublane -> round the batch tile to 16; f32 needs 8.
    row_mult = 16 if jnp.dtype(matmul_dtype).itemsize < 4 else 8
    tb = min(tile_b, _round_up(B, row_mult))
    grid = (pl.cdiv(B, tb),)

    # Cast only the tiny, VMEM-resident w1 in the wrapper. Do NOT cast x here:
    # that would be an extra un-hidden HBM read+write pass over the whole batch.
    w1 = w1.astype(matmul_dtype)

    x_bytes = x.dtype.itemsize
    cost = pl.CostEstimate(
        flops=2 * B * IN_FEATURES * HIDDEN_PAD + 2 * B * HIDDEN_PAD,
        transcendentals=2 * B,  # 1 exp + 1 log per row
        bytes_accessed=(B * IN_FEATURES * x_bytes
                        + IN_FEATURES * HIDDEN_PAD * w1.dtype.itemsize
                        + (HIDDEN_PAD + HIDDEN_PAD * NUM_CLASSES + NUM_CLASSES) * 4
                        + B * NUM_CLASSES * 4),
    )

    # Double-buffered x tile dominates VMEM. Only raise the scoped limit when
    # the footprint exceeds the 32 MiB default, keeping headroom under v7x's
    # 64 MiB physical VMEM.
    footprint = (2 * tb * IN_FEATURES * x_bytes
                 + 2 * tb * NUM_CLASSES * 4
                 + IN_FEATURES * HIDDEN_PAD * w1.dtype.itemsize
                 + (HIDDEN_PAD + HIDDEN_PAD * NUM_CLASSES + NUM_CLASSES) * 4)
    vmem_limit = None
    if footprint > (30 << 20):
        vmem_limit = min(footprint + (8 << 20), 56 << 20)

    return pl.pallas_call(
        domain_classifier_kernel,
        out_shape=jax.ShapeDtypeStruct((B, NUM_CLASSES), jnp.float32),
        grid=grid,
        in_specs=[
            pl.BlockSpec((tb, IN_FEATURES), lambda i: (i, 0)),          # x: streamed
            pl.BlockSpec((IN_FEATURES, HIDDEN_PAD), lambda i: (0, 0)),  # w1: resident
            pl.BlockSpec((1, HIDDEN_PAD), lambda i: (0, 0)),            # b1: resident
            pl.BlockSpec((HIDDEN_PAD, NUM_CLASSES), lambda i: (0, 0)),  # w2: resident
            pl.BlockSpec((1, NUM_CLASSES), lambda i: (0, 0)),           # b2: resident
        ],
        out_specs=pl.BlockSpec((tb, NUM_CLASSES), lambda i: (i, 0)),
        compiler_params=pltpu.CompilerParams(
            dimension_semantics=("parallel",),  # megacore sharding on multi-TC chips
            vmem_limit_bytes=vmem_limit,
        ),
        cost_estimate=cost,
    )(x, w1, b1, w2, b2)


def init_params(key):
    """nn.Linear-style init (uniform +-1/sqrt(fan_in)); returns padded + raw."""
    k1, k2, k3, k4 = jax.random.split(key, 4)
    bound1 = 1.0 / jnp.sqrt(jnp.float32(IN_FEATURES))
    bound2 = 1.0 / jnp.sqrt(jnp.float32(HIDDEN))
    w1 = jax.random.uniform(k1, (IN_FEATURES, HIDDEN), jnp.float32, -bound1, bound1)
    b1 = jax.random.uniform(k2, (1, HIDDEN), jnp.float32, -bound1, bound1)
    w2 = jax.random.uniform(k3, (HIDDEN, NUM_CLASSES), jnp.float32, -bound2, bound2)
    b2 = jax.random.uniform(k4, (1, NUM_CLASSES), jnp.float32, -bound2, bound2)
    # Zero-pad HIDDEN 100 -> 128: identical numerics, clean lane tiles.
    pad = HIDDEN_PAD - HIDDEN
    w1p = jnp.pad(w1, ((0, 0), (0, pad)))
    b1p = jnp.pad(b1, ((0, 0), (0, pad)))
    w2p = jnp.pad(w2, ((0, pad), (0, 0)))
    return (w1p, b1p, w2p, b2), (w1, b1, w2, b2)


def reference_forward(x, w1, b1, w2, b2):
    if x.ndim > 2:
        x = x.reshape(x.shape[0], -1)
    h = jnp.maximum(jnp.dot(x, w1, precision=jax.lax.Precision.HIGHEST) + b1, 0.0)
    logits = jnp.dot(h, w2, precision=jax.lax.Precision.HIGHEST) + b2
    return jax.nn.log_softmax(logits, axis=1)


if __name__ == "__main__":
    key = jax.random.PRNGKey(0)
    kx, kp = jax.random.split(key)

    B = 8  # small demo batch; feature map is (48, 4, 4) -> flattened to 768
    x = jax.random.normal(kx, (B, 48, 4, 4), jnp.float32)
    (w1p, b1p, w2p, b2), (w1, b1, w2, _) = init_params(kp)

    ref = reference_forward(x, w1, b1, w2, b2)

    # f32 debug/reference path: matches the f32 reference tightly.
    out_f32 = domain_classifier_forward(x, w1p, b1p, w2p, b2, constant=1.0,
                                        matmul_dtype=jnp.float32)
    out_f32 = jax.block_until_ready(out_f32)
    assert out_f32.shape == (B, NUM_CLASSES)
    assert jnp.allclose(out_f32, ref, atol=2e-3, rtol=2e-3), "f32 mismatch vs reference"

    # Default bf16-matmul path (f32 accumulation, f32 epilogue): intended
    # production path on all chip generations.
    out = domain_classifier_forward(x, w1p, b1p, w2p, b2, constant=1.0)
    out = jax.block_until_ready(out)
    assert out.shape == (B, NUM_CLASSES)
    assert jnp.allclose(out, ref, atol=5e-2, rtol=5e-2), "bf16 mismatch vs reference"

    print("KERNEL_OK")
</pallas_src>

<mosaic_0001>
module attributes {stable_mosaic.version = 11 : i64} {
  func.func @domain_classifier_kernel(%arg0: i32, %arg1: memref<8x768xf32, #tpu.memory_space<vmem>>, %arg2: memref<768x128xf32, #tpu.memory_space<vmem>>, %arg3: memref<1x128xf32, #tpu.memory_space<vmem>>, %arg4: memref<128x2xf32, #tpu.memory_space<vmem>>, %arg5: memref<1x2xf32, #tpu.memory_space<vmem>>, %arg6: memref<8x2xf32, #tpu.memory_space<vmem>>) attributes {dimension_semantics = [#tpu.dimension_semantics<parallel>], iteration_bounds = array<i64: 1>, scalar_prefetch = 0 : i64, scratch_operands = 0 : i64, tpu.core_type = #tpu.core_type<tc>, window_params = [{transform_indices = @transform_0, window_bounds = array<i64: 8, 768>}, {pipeline_mode = #tpu.pipeline_mode<synchronous>, transform_indices = @transform_1, window_bounds = array<i64: 768, 128>}, {pipeline_mode = #tpu.pipeline_mode<synchronous>, transform_indices = @transform_2, window_bounds = array<i64: 1, 128>}, {pipeline_mode = #tpu.pipeline_mode<synchronous>, transform_indices = @transform_3, window_bounds = array<i64: 128, 2>}, {pipeline_mode = #tpu.pipeline_mode<synchronous>, transform_indices = @transform_4, window_bounds = array<i64: 1, 2>}, {transform_indices = @transform_5, window_bounds = array<i64: 8, 2>}]} {
    %c0 = arith.constant 0 : index
    %c0_0 = arith.constant 0 : index
    %0 = vector.load %arg1[%c0, %c0_0] : memref<8x768xf32, #tpu.memory_space<vmem>>, vector<8x768xf32>
    %c0_1 = arith.constant 0 : index
    %c0_2 = arith.constant 0 : index
    %1 = vector.load %arg2[%c0_1, %c0_2] : memref<768x128xf32, #tpu.memory_space<vmem>>, vector<768x128xf32>
    %cst = arith.constant dense<0.000000e+00> : vector<8x128xf32>
    %2 = tpu.matmul %0, %1, %cst {dimension_numbers = #tpu.dot_dimension_numbers<[1], [0], [0], [1], [0, 0, 1, 1], [], []>} : vector<8x768xf32>, vector<768x128xf32>, vector<8x128xf32> -> vector<8x128xf32>
    %c0_3 = arith.constant 0 : index
    %c0_4 = arith.constant 0 : index
    %3 = vector.load %arg3[%c0_3, %c0_4] : memref<1x128xf32, #tpu.memory_space<vmem>>, vector<1x128xf32>
    %4 = vector.broadcast %3 : vector<1x128xf32> to vector<8x128xf32>
    %5 = arith.addf %2, %4 : vector<8x128xf32>
    %cst_5 = arith.constant 0.000000e+00 : f32
    %6 = vector.broadcast %cst_5 : f32 to vector<8x128xf32>
    %7 = arith.maximumf %5, %6 : vector<8x128xf32>
    %c0_6 = arith.constant 0 : index
    %c0_7 = arith.constant 0 : index
    %8 = vector.load %arg4[%c0_6, %c0_7] : memref<128x2xf32, #tpu.memory_space<vmem>>, vector<128x2xf32>
    %c0_8 = arith.constant 0 : index
    %c0_9 = arith.constant 0 : index
    %9 = vector.load %arg5[%c0_8, %c0_9] : memref<1x2xf32, #tpu.memory_space<vmem>>, vector<1x2xf32>
    %10 = vector.extract_strided_slice %8 {offsets = [0, 1], sizes = [128, 1], strides = [1, 1]} : vector<128x2xf32> to vector<128x1xf32>
    %11 = vector.extract_strided_slice %8 {offsets = [0, 0], sizes = [128, 1], strides = [1, 1]} : vector<128x2xf32> to vector<128x1xf32>
    %12 = arith.subf %10, %11 : vector<128x1xf32>
    %cst_10 = arith.constant dense<0.000000e+00> : vector<8x1xf32>
    %13 = tpu.matmul %7, %12, %cst_10 {dimension_numbers = #tpu.dot_dimension_numbers<[1], [0], [0], [1], [0, 0, 1, 1], [], []>} : vector<8x128xf32>, vector<128x1xf32>, vector<8x1xf32> -> vector<8x1xf32>
    %14 = vector.extract_strided_slice %9 {offsets = [0, 1], sizes = [1, 1], strides = [1, 1]} : vector<1x2xf32> to vector<1x1xf32>
    %15 = vector.extract_strided_slice %9 {offsets = [0, 0], sizes = [1, 1], strides = [1, 1]} : vector<1x2xf32> to vector<1x1xf32>
    %16 = arith.subf %14, %15 : vector<1x1xf32>
    %17 = vector.broadcast %16 : vector<1x1xf32> to vector<8x1xf32>
    %18 = arith.addf %13, %17 : vector<8x1xf32>
    %cst_11 = arith.constant 0.000000e+00 : f32
    %19 = vector.broadcast %cst_11 : f32 to vector<8x1xf32>
    %20 = arith.maximumf %18, %19 : vector<8x1xf32>
    %21 = math.absf %18 : vector<8x1xf32>
    %cst_12 = arith.constant 0.000000e+00 : f32
    %22 = vector.broadcast %cst_12 : f32 to vector<8x1xf32>
    %23 = arith.subf %22, %21 : vector<8x1xf32>
    %24 = math.exp %23 : vector<8x1xf32>
    %cst_13 = arith.constant 1.000000e+00 : f32
    %25 = vector.broadcast %cst_13 : f32 to vector<8x1xf32>
    %26 = arith.addf %25, %24 : vector<8x1xf32>
    %27 = math.log %26 : vector<8x1xf32>
    %28 = arith.addf %20, %27 : vector<8x1xf32>
    %cst_14 = arith.constant 0.000000e+00 : f32
    %29 = vector.broadcast %cst_14 : f32 to vector<8x1xf32>
    %30 = arith.subf %29, %28 : vector<8x1xf32>
    %c0_15 = arith.constant 0 : index
    %c0_16 = arith.constant 0 : index
    %31 = vector.load %arg6[%c0_15, %c0_16] : memref<8x2xf32, #tpu.memory_space<vmem>>, vector<8x1xf32>
    tpu.vector_store %arg6[%c0_15, %c0_16], %30 {strides = array<i32>} : memref<8x2xf32, #tpu.memory_space<vmem>>, vector<8x1xf32>,
    %32 = arith.subf %18, %28 : vector<8x1xf32>
    %c0_17 = arith.constant 0 : index
    %c1 = arith.constant 1 : index
    %33 = vector.load %arg6[%c0_17, %c1] : memref<8x2xf32, #tpu.memory_space<vmem>>, vector<8x1xf32>
    tpu.vector_store %arg6[%c0_17, %c1], %32 {strides = array<i32>} : memref<8x2xf32, #tpu.memory_space<vmem>>, vector<8x1xf32>,
    return
  }
  func.func @transform_0(%arg0: i32) -> (i32, i32) {
    %c0_i32 = arith.constant 0 : i32
    %c0_i32_0 = arith.constant 0 : i32
    return %arg0, %c0_i32 : i32, i32
  }
  func.func @transform_1(%arg0: i32) -> (i32, i32) {
    %c0_i32 = arith.constant 0 : i32
    %c0_i32_0 = arith.constant 0 : i32
    %c0_i32_1 = arith.constant 0 : i32
    return %c0_i32, %c0_i32_0 : i32, i32
  }
  func.func @transform_2(%arg0: i32) -> (i32, i32) {
    %c0_i32 = arith.constant 0 : i32
    %c0_i32_0 = arith.constant 0 : i32
    %c0_i32_1 = arith.constant 0 : i32
    return %c0_i32, %c0_i32_0 : i32, i32
  }
  func.func @transform_3(%arg0: i32) -> (i32, i32) {
    %c0_i32 = arith.constant 0 : i32
    %c0_i32_0 = arith.constant 0 : i32
    %c0_i32_1 = arith.constant 0 : i32
    return %c0_i32, %c0_i32_0 : i32, i32
  }
  func.func @transform_4(%arg0: i32) -> (i32, i32) {
    %c0_i32 = arith.constant 0 : i32
    %c0_i32_0 = arith.constant 0 : i32
    %c0_i32_1 = arith.constant 0 : i32
    return %c0_i32, %c0_i32_0 : i32, i32
  }
  func.func @transform_5(%arg0: i32) -> (i32, i32) {
    %c0_i32 = arith.constant 0 : i32
    %c0_i32_0 = arith.constant 0 : i32
    return %arg0, %c0_i32 : i32, i32
  }
}

</mosaic_0001>

<llo_original>
// kernel: tpu_custom_call.1
$region0: #{tpu_custom_call.1}
  #allocation0 [shape = 'u32[]', space=smem, size = 0x4, offset = 0x4, fixed_abs, tag = 'smem constant byte address 0x4 - core index']
  #allocation1 [shape = 'u32[72,128]{1,0:T(1,128)}', space=vmem, size = 0x9000, scoped, tag = 'internal scratch']
  %s0 = inlined_call_operand.vmem [shape: f32[8,768], index: 0, kind: input, shape index: {}]
  %s1 = inlined_call_operand.hbm [shape: f32[768,128], index: 1, kind: input, shape index: {}]
  %s2 = inlined_call_operand.vmem [shape: f32[1,128], index: 2, kind: input, shape index: {}]
  %s3 = inlined_call_operand.vmem [shape: f32[128,2], index: 3, kind: input, shape index: {}]
  %s4 = inlined_call_operand.vmem [shape: f32[1,2], index: 4, kind: input, shape index: {}]
  %s5 = inlined_call_operand.vmem [shape: f32[8,2], index: 5, kind: output, shape index: {}]
  %s6 = sld [smem:[#allocation0]]
  $region34: #{tpu_custom_call.1} parent=0
    _
  %s8 = ssub.s32 1, %s6
  %s9 = scalar_select 0, %s8, %s6
  $region1: #{tpu_custom_call.1} parent=0
    #allocation2 [shape = 'u8[393216]{0}', space=vmem, size = 0x60000, scoped, tag = 'input window, operand 1, single buffered']
    #allocation3 [shape = 's32[1]{0}', space=sflag, size = 0x4, scoped, tag = 'scoped memory for tpu_custom_call.1']
    %10 = vsyncpa [#allocation3], 0
    // Predicated region
    $region2: #{tpu_custom_call.1} parent=1 // pred_check
      _
    $region3: #{tpu_custom_call.1} parent=1 // pred_check_branch
      %12 = sbr.rel (0) target = $region5
    $region4: #{tpu_custom_call.1} parent=1 // pred_region
      _
    $region5: #{tpu_custom_call.1} parent=1 // pred_fallthru
      _
    // Predicated region
    $region6: #{tpu_custom_call.1} parent=1 // pred_check
      _
    $region7: #{tpu_custom_call.1} parent=1 // pred_check_branch
      %14 = sbr.rel (0) target = $region9
    $region8: #{tpu_custom_call.1} parent=1 // pred_region
      %16 = vsyncadd [#allocation3], 0
      %s17 = sshll.u32 %s1, 4
      %s18 = int_to_ptr.hbm [resolvable:$true] %s17
      %s19 = sshll.u32 [#allocation2], 4
      %s20 = int_to_ptr.vmem [resolvable:$true] %s19
      %25 = dma.hbm_to_vmem [thread:$0]  %s18, 12288, %s20, [#allocation3], 128, 128, 8
    $region9: #{tpu_custom_call.1} parent=1 // pred_fallthru
      _
    // Predicated region
    $region10: #{tpu_custom_call.1} parent=1 // pred_check
      _
    $region11: #{tpu_custom_call.1} parent=1 // pred_check_branch
      %27 = sbr.rel (0) target = $region13
    $region12: #{tpu_custom_call.1} parent=1 // pred_region
      _
    $region13: #{tpu_custom_call.1} parent=1 // pred_fallthru
      _
    // Predicated region
    $region14: #{tpu_custom_call.1} parent=1 // pred_check
      _
    $region15: #{tpu_custom_call.1} parent=1 // pred_check_branch
      %29 = sbr.rel (0) target = $region17
    $region16: #{tpu_custom_call.1} parent=1 // pred_region
      _
    $region17: #{tpu_custom_call.1} parent=1 // pred_fallthru
      _
    // Predicated region
    $region18: #{tpu_custom_call.1} parent=1 // pred_check
      _
    $region19: #{tpu_custom_call.1} parent=1 // pred_check_branch
      %31 = sbr.rel (0) target = $region21
    $region20: #{tpu_custom_call.1} parent=1 // pred_region
      _
    $region21: #{tpu_custom_call.1} parent=1 // pred_fallthru
      _
    // Predicated region
    $region22: #{tpu_custom_call.1} parent=1 // pred_check
      _
    $region23: #{tpu_custom_call.1} parent=1 // pred_check_branch
      %33 = sbr.rel (0) target = $region25
    $region24: #{tpu_custom_call.1} parent=1 // pred_region
      %35 = dma.done [#allocation3], 12288
    $region25: #{tpu_custom_call.1} parent=1 // pred_fallthru
      _
    %v36 = vld [vmem:[%s0] sm:$0xff]
    %v37 = vld [vmem:[%s0 + $0x8] sm:$0xff]
    %v38 = vld [vmem:[%s0 + $0x10] sm:$0xff]
    %v39 = vld [vmem:[%s0 + $0x18] sm:$0xff]
    %v40 = vld [vmem:[%s0 + $0x20] sm:$0xff]
    %v41 = vld [vmem:[%s0 + $0x28] sm:$0xff]
    %v42 = vld [vmem:[#allocation2] sm:$0xff]
    %v43 = vld [vmem:[#allocation2 + $0x8] sm:$0xff]
    %v44 = vld [vmem:[#allocation2 + $0x10] sm:$0xff]
    %v45 = vld [vmem:[#allocation2 + $0x18] sm:$0xff]
    %v46 = vld [vmem:[#allocation2 + $0x20] sm:$0xff]
    %v47 = vld [vmem:[#allocation2 + $0x28] sm:$0xff]
    %v48 = vld [vmem:[#allocation2 + $0x30] sm:$0xff]
    %v49 = vld [vmem:[#allocation2 + $0x38] sm:$0xff]
    %v50 = vld [vmem:[#allocation2 + $0x40] sm:$0xff]
    %v51 = vld [vmem:[#allocation2 + $0x48] sm:$0xff]
    %v52 = vld [vmem:[#allocation2 + $0x50] sm:$0xff]
    %v53 = vld [vmem:[#allocation2 + $0x58] sm:$0xff]
    %v54 = vld [vmem:[#allocation2 + $0x60] sm:$0xff]
    %v55 = vld [vmem:[#allocation2 + $0x68] sm:$0xff]
    %v56 = vld [vmem:[#allocation2 + $0x70] sm:$0xff]
    %v57 = vld [vmem:[#allocation2 + $0x78] sm:$0xff]
    %v58 = vld [vmem:[#allocation2 + $0x80] sm:$0xff]
    %v59 = vld [vmem:[#allocation2 + $0x88] sm:$0xff]
    %v60 = vld [vmem:[#allocation2 + $0x90] sm:$0xff]
    %v61 = vld [vmem:[#allocation2 + $0x98] sm:$0xff]
    %v62 = vld [vmem:[#allocation2 + $0xa0] sm:$0xff]
    %v63 = vld [vmem:[#allocation2 + $0xa8] sm:$0xff]
    %v64 = vld [vmem:[#allocation2 + $0xb0] sm:$0xff]
    %v65 = vld [vmem:[#allocation2 + $0xb8] sm:$0xff]
    %v66 = vld [vmem:[#allocation2 + $0xc0] sm:$0xff]
    %v67 = vld [vmem:[#allocation2 + $0xc8] sm:$0xff]
    %v68 = vld [vmem:[#allocation2 + $0xd0] sm:$0xff]
    %v69 = vld [vmem:[#allocation2 + $0xd8] sm:$0xff]
    %v70 = vld [vmem:[#allocation2 + $0xe0] sm:$0xff]
    %v71 = vld [vmem:[#allocation2 + $0xe8] sm:$0xff]
    %v72 = vld [vmem:[#allocation2 + $0xf0] sm:$0xff]
    %v73 = vld [vmem:[#allocation2 + $0xf8] sm:$0xff]
    %v74 = vld [vmem:[#allocation2 + $0x100] sm:$0xff]
    %v75 = vld [vmem:[#allocation2 + $0x108] sm:$0xff]
    %v76 = vld [vmem:[#allocation2 + $0x110] sm:$0xff]
    %v77 = vld [vmem:[#allocation2 + $0x118] sm:$0xff]
    %v78 = vld [vmem:[#allocation2 + $0x120] sm:$0xff]
    %v79 = vld [vmem:[#allocation2 + $0x128] sm:$0xff]
    %v80 = vld [vmem:[#allocation2 + $0x130] sm:$0xff]
    %v81 = vld [vmem:[#allocation2 + $0x138] sm:$0xff]
    %v82 = vld [vmem:[#allocation2 + $0x140] sm:$0xff]
    %v83 = vld [vmem:[#allocation2 + $0x148] sm:$0xff]
    %v84 = vld [vmem:[#allocation2 + $0x150] sm:$0xff]
    %v85 = vld [vmem:[#allocation2 + $0x158] sm:$0xff]
    %v86 = vld [vmem:[#allocation2 + $0x160] sm:$0xff]
    %v87 = vld [vmem:[#allocation2 + $0x168] sm:$0xff]
    %v88 = vld [vmem:[#allocation2 + $0x170] sm:$0xff]
    %v89 = vld [vmem:[#allocation2 + $0x178] sm:$0xff]
    %v90 = vld [vmem:[#allocation2 + $0x180] sm:$0xff]
    %v91 = vld [vmem:[#allocation2 + $0x188] sm:$0xff]
    %v92 = vld [vmem:[#allocation2 + $0x190] sm:$0xff]
    %v93 = vld [vmem:[#allocation2 + $0x198] sm:$0xff]
    %v94 = vld [vmem:[#allocation2 + $0x1a0] sm:$0xff]
    %v95 = vld [vmem:[#allocation2 + $0x1a8] sm:$0xff]
    %v96 = vld [vmem:[#allocation2 + $0x1b0] sm:$0xff]
    %v97 = vld [vmem:[#allocation2 + $0x1b8] sm:$0xff]
    %v98 = vld [vmem:[#allocation2 + $0x1c0] sm:$0xff]
    %v99 = vld [vmem:[#allocation2 + $0x1c8] sm:$0xff]
    %v100 = vld [vmem:[#allocation2 + $0x1d0] sm:$0xff]
    %v101 = vld [vmem:[#allocation2 + $0x1d8] sm:$0xff]
    %v102 = vld [vmem:[#allocation2 + $0x1e0] sm:$0xff]
    %v103 = vld [vmem:[#allocation2 + $0x1e8] sm:$0xff]
    %v104 = vld [vmem:[#allocation2 + $0x1f0] sm:$0xff]
    %v105 = vld [vmem:[#allocation2 + $0x1f8] sm:$0xff]
    %v106 = vld [vmem:[#allocation2 + $0x200] sm:$0xff]
    %v107 = vld [vmem:[#allocation2 + $0x208] sm:$0xff]
    %v108 = vld [vmem:[#allocation2 + $0x210] sm:$0xff]
    %v109 = vld [vmem:[#allocation2 + $0x218] sm:$0xff]
    %v110 = vld [vmem:[#allocation2 + $0x220] sm:$0xff]
    %v111 = vld [vmem:[#allocation2 + $0x228] sm:$0xff]
    %v112 = vld [vmem:[#allocation2 + $0x230] sm:$0xff]
    %v113 = vld [vmem:[#allocation2 + $0x238] sm:$0xff]
    %v114 = vld [vmem:[#allocation2 + $0x240] sm:$0xff]
    %v115 = vld [vmem:[#allocation2 + $0x248] sm:$0xff]
    %v116 = vld [vmem:[#allocation2 + $0x250] sm:$0xff]
    %v117 = vld [vmem:[#allocation2 + $0x258] sm:$0xff]
    %v118 = vld [vmem:[#allocation2 + $0x260] sm:$0xff]
    %v119 = vld [vmem:[#allocation2 + $0x268] sm:$0xff]
    %v120 = vld [vmem:[#allocation2 + $0x270] sm:$0xff]
    %v121 = vld [vmem:[#allocation2 + $0x278] sm:$0xff]
    %v122 = vld [vmem:[#allocation2 + $0x280] sm:$0xff]
    %v123 = vld [vmem:[#allocation2 + $0x288] sm:$0xff]
    %v124 = vld [vmem:[#allocation2 + $0x290] sm:$0xff]
    %v125 = vld [vmem:[#allocation2 + $0x298] sm:$0xff]
    %v126 = vld [vmem:[#allocation2 + $0x2a0] sm:$0xff]
    %v127 = vld [vmem:[#allocation2 + $0x2a8] sm:$0xff]
    %v128 = vld [vmem:[#allocation2 + $0x2b0] sm:$0xff]
    %v129 = vld [vmem:[#allocation2 + $0x2b8] sm:$0xff]
    %v130 = vld [vmem:[#allocation2 + $0x2c0] sm:$0xff]
    %v131 = vld [vmem:[#allocation2 + $0x2c8] sm:$0xff]
    %v132 = vld [vmem:[#allocation2 + $0x2d0] sm:$0xff]
    %v133 = vld [vmem:[#allocation2 + $0x2d8] sm:$0xff]
    %v134 = vld [vmem:[#allocation2 + $0x2e0] sm:$0xff]
    %v135 = vld [vmem:[#allocation2 + $0x2e8] sm:$0xff]
    %v136 = vld [vmem:[#allocation2 + $0x2f0] sm:$0xff]
    %v137 = vld [vmem:[#allocation2 + $0x2f8] sm:$0xff]
    %v138 = vld [vmem:[%s2] sm:$0x1]
    %v140 = vperm.slane %v138, 0
    %142 = vmatpush.msra.mxu0 %v57
    %143 = vmatpush.msra.mxu0 %v56
    %144 = vmatpush.msra.mxu0 %v55
    %145 = vmatpush.msra.mxu0 %v54
    %146 = vmatpush.msra.mxu0 %v53
    %147 = vmatpush.msra.mxu0 %v52
    %148 = vmatpush.msra.mxu0 %v51
    %149 = vmatpush.msra.mxu0 %v50
    %150 = vmatpush.msra.mxu0 %v49
    %151 = vmatpush.msra.mxu0 %v48
    %152 = vmatpush.msra.mxu0 %v47
    %153 = vmatpush.msra.mxu0 %v46
    %154 = vmatpush.msra.mxu0 %v45
    %155 = vmatpush.msra.mxu0 %v44
    %156 = vmatpush.msra.mxu0 %v43
    %157 = vmatpush.msra.mxu0 %v42
    %158 = vmatmul.f32.gmra.mxu0 %v36
    %v159 = vpop.f32.mrf.mxu0
    %v160 = vadd.f32 %v140, %v159
    %161 = vdwg.mxu0
    %162 = vmatpush.msra.mxu0 %v73
    %163 = vmatpush.msra.mxu0 %v72
    %164 = vmatpush.msra.mxu0 %v71
    %165 = vmatpush.msra.mxu0 %v70
    %166 = vmatpush.msra.mxu0 %v69
    %167 = vmatpush.msra.mxu0 %v68
    %168 = vmatpush.msra.mxu0 %v67
    %169 = vmatpush.msra.mxu0 %v66
    %170 = vmatpush.msra.mxu0 %v65
    %171 = vmatpush.msra.mxu0 %v64
    %172 = vmatpush.msra.mxu0 %v63
    %173 = vmatpush.msra.mxu0 %v62
    %174 = vmatpush.msra.mxu0 %v61
    %175 = vmatpush.msra.mxu0 %v60
    %176 = vmatpush.msra.mxu0 %v59
    %177 = vmatpush.msra.mxu0 %v58
    %178 = vmatmul.f32.gmra.mxu0 %v37
    %v179 = vpop.f32.mrf.mxu0
    %v180 = vadd.f32 %v160, %v179
    %181 = vdwg.mxu0
    %182 = vmatpush.msra.mxu0 %v89
    %183 = vmatpush.msra.mxu0 %v88
    %184 = vmatpush.msra.mxu0 %v87
    %185 = vmatpush.msra.mxu0 %v86
    %186 = vmatpush.msra.mxu0 %v85
    %187 = vmatpush.msra.mxu0 %v84
    %188 = vmatpush.msra.mxu0 %v83
    %189 = vmatpush.msra.mxu0 %v82
    %190 = vmatpush.msra.mxu0 %v81
    %191 = vmatpush.msra.mxu0 %v80
    %192 = vmatpush.msra.mxu0 %v79
    %193 = vmatpush.msra.mxu0 %v78
    %194 = vmatpush.msra.mxu0 %v77
    %195 = vmatpush.msra.mxu0 %v76
    %196 = vmatpush.msra.mxu0 %v75
    %197 = vmatpush.msra.mxu0 %v74
    %198 = vmatmul.f32.gmra.mxu0 %v38
    %v199 = vpop.f32.mrf.mxu0
    %v200 = vadd.f32 %v180, %v199
    %201 = vdwg.mxu0
    %202 = vmatpush.msra.mxu0 %v105
    %203 = vmatpush.msra.mxu0 %v104
    %204 = vmatpush.msra.mxu0 %v103
    %205 = vmatpush.msra.mxu0 %v102
    %206 = vmatpush.msra.mxu0 %v101
    %207 = vmatpush.msra.mxu0 %v100
    %208 = vmatpush.msra.mxu0 %v99
    %209 = vmatpush.msra.mxu0 %v98
    %210 = vmatpush.msra.mxu0 %v97
    %211 = vmatpush.msra.mxu0 %v96
    %212 = vmatpush.msra.mxu0 %v95
    %213 = vmatpush.msra.mxu0 %v94
    %214 = vmatpush.msra.mxu0 %v93
    %215 = vmatpush.msra.mxu0 %v92
    %216 = vmatpush.msra.mxu0 %v91
    %217 = vmatpush.msra.mxu0 %v90
    %218 = vmatmul.f32.gmra.mxu0 %v39
    %v219 = vpop.f32.mrf.mxu0
    %v220 = vadd.f32 %v200, %v219
    %221 = vdwg.mxu0
    %222 = vmatpush.msra.mxu0 %v121
    %223 = vmatpush.msra.mxu0 %v120
    %224 = vmatpush.msra.mxu0 %v119
    %225 = vmatpush.msra.mxu0 %v118
    %226 = vmatpush.msra.mxu0 %v117
    %227 = vmatpush.msra.mxu0 %v116
    %228 = vmatpush.msra.mxu0 %v115
    %229 = vmatpush.msra.mxu0 %v114
    %230 = vmatpush.msra.mxu0 %v113
    %231 = vmatpush.msra.mxu0 %v112
    %232 = vmatpush.msra.mxu0 %v111
    %233 = vmatpush.msra.mxu0 %v110
    %234 = vmatpush.msra.mxu0 %v109
    %235 = vmatpush.msra.mxu0 %v108
    %236 = vmatpush.msra.mxu0 %v107
    %237 = vmatpush.msra.mxu0 %v106
    %238 = vmatmul.f32.gmra.mxu0 %v40
    %v239 = vpop.f32.mrf.mxu0
    %v240 = vadd.f32 %v220, %v239
    %241 = vdwg.mxu0
    %242 = vmatpush.msra.mxu0 %v137
    %243 = vmatpush.msra.mxu0 %v136
    %244 = vmatpush.msra.mxu0 %v135
    %245 = vmatpush.msra.mxu0 %v134
    %246 = vmatpush.msra.mxu0 %v133
    %247 = vmatpush.msra.mxu0 %v132
    %248 = vmatpush.msra.mxu0 %v131
    %249 = vmatpush.msra.mxu0 %v130
    %250 = vmatpush.msra.mxu0 %v129
    %251 = vmatpush.msra.mxu0 %v128
    %252 = vmatpush.msra.mxu0 %v127
    %253 = vmatpush.msra.mxu0 %v126
    %254 = vmatpush.msra.mxu0 %v125
    %255 = vmatpush.msra.mxu0 %v124
    %256 = vmatpush.msra.mxu0 %v123
    %257 = vmatpush.msra.mxu0 %v122
    %258 = vmatmul.f32.gmra.mxu0 %v41
    %v259 = vpop.f32.mrf.mxu0
    %v260 = vadd.f32 %v240, %v259
    %261 = vdwg.mxu0
    %v262 = vmax.f32 %v260, 0.0
    %v263 = vld [vmem:[%s3] sm:$0xff]
    %v264 = vld [vmem:[%s3 + $0x8] sm:$0xff]
    %v265 = vld [vmem:[%s3 + $0x10] sm:$0xff]
    %v266 = vld [vmem:[%s3 + $0x18] sm:$0xff]
    %v267 = vld [vmem:[%s3 + $0x20] sm:$0xff]
    %v268 = vld [vmem:[%s3 + $0x28] sm:$0xff]
    %v269 = vld [vmem:[%s3 + $0x30] sm:$0xff]
    %v270 = vld [vmem:[%s3 + $0x38] sm:$0xff]
    %v271 = vld [vmem:[%s3 + $0x40] sm:$0xff]
    %v272 = vld [vmem:[%s3 + $0x48] sm:$0xff]
    %v273 = vld [vmem:[%s3 + $0x50] sm:$0xff]
    %v274 = vld [vmem:[%s3 + $0x58] sm:$0xff]
    %v275 = vld [vmem:[%s3 + $0x60] sm:$0xff]
    %v276 = vld [vmem:[%s3 + $0x68] sm:$0xff]
    %v277 = vld [vmem:[%s3 + $0x70] sm:$0xff]
    %v278 = vld [vmem:[%s3 + $0x78] sm:$0xff]
    %v279 = vld [vmem:[%s4] sm:$0x1]
    %296 = vrot.lane.b32.xlu0 %v263, 1
    %v297 = vpop.permute.xlu0 %296
    %298 = vrot.lane.b32.xlu0 %v264, 1
    %v299 = vpop.permute.xlu0 %298
    %300 = vrot.lane.b32.xlu0 %v265, 1
    %v301 = vpop.permute.xlu0 %300
    %302 = vrot.lane.b32.xlu0 %v266, 1
    %v303 = vpop.permute.xlu0 %302
    %304 = vrot.lane.b32.xlu0 %v267, 1
    %v305 = vpop.permute.xlu0 %304
    %306 = vrot.lane.b32.xlu0 %v268, 1
    %v307 = vpop.permute.xlu0 %306
    %308 = vrot.lane.b32.xlu0 %v269, 1
    %v309 = vpop.permute.xlu0 %308
    %310 = vrot.lane.b32.xlu0 %v270, 1
    %v311 = vpop.permute.xlu0 %310
    %312 = vrot.lane.b32.xlu0 %v271, 1
    %v313 = vpop.permute.xlu0 %312
    %314 = vrot.lane.b32.xlu0 %v272, 1
    %v315 = vpop.permute.xlu0 %314
    %316 = vrot.lane.b32.xlu0 %v273, 1
    %v317 = vpop.permute.xlu0 %316
    %318 = vrot.lane.b32.xlu0 %v274, 1
    %v319 = vpop.permute.xlu0 %318
    %320 = vrot.lane.b32.xlu0 %v275, 1
    %v321 = vpop.permute.xlu0 %320
    %322 = vrot.lane.b32.xlu0 %v276, 1
    %v323 = vpop.permute.xlu0 %322
    %324 = vrot.lane.b32.xlu0 %v277, 1
    %v325 = vpop.permute.xlu0 %324
    %326 = vrot.lane.b32.xlu0 %v278, 1
    %v327 = vpop.permute.xlu0 %326
    %v344 = vsub.f32 %v263, %v297
    %v345 = vsub.f32 %v264, %v299
    %v346 = vsub.f32 %v265, %v301
    %v347 = vsub.f32 %v266, %v303
    %v348 = vsub.f32 %v267, %v305
    %v349 = vsub.f32 %v268, %v307
    %v350 = vsub.f32 %v269, %v309
    %v351 = vsub.f32 %v270, %v311
    %v352 = vsub.f32 %v271, %v313
    %v353 = vsub.f32 %v272, %v315
    %v354 = vsub.f32 %v273, %v317
    %v355 = vsub.f32 %v274, %v319
    %v356 = vsub.f32 %v275, %v321
    %v357 = vsub.f32 %v276, %v323
    %v358 = vsub.f32 %v277, %v325
    %v359 = vsub.f32 %v278, %v327
    %361 = vrot.lane.b32.xlu0 %v279, 1
    %v362 = vpop.permute.xlu0 %361
    %v364 = vsub.f32 %v279, %v362
    %v366 = vperm.slane %v364, 0
    %383 = vrot.lane.b32.xlu0 %v344, 127
    %v384 = vpop.permute.xlu0 %383
    %385 = vrot.lane.b32.xlu0 %v345, 127
    %v386 = vpop.permute.xlu0 %385
    %387 = vrot.lane.b32.xlu0 %v346, 127
    %v388 = vpop.permute.xlu0 %387
    %389 = vrot.lane.b32.xlu0 %v347, 127
    %v390 = vpop.permute.xlu0 %389
    %391 = vrot.lane.b32.xlu0 %v348, 127
    %v392 = vpop.permute.xlu0 %391
    %393 = vrot.lane.b32.xlu0 %v349, 127
    %v394 = vpop.permute.xlu0 %393
    %395 = vrot.lane.b32.xlu0 %v350, 127
    %v396 = vpop.permute.xlu0 %395
    %397 = vrot.lane.b32.xlu0 %v351, 127
    %v398 = vpop.permute.xlu0 %397
    %399 = vrot.lane.b32.xlu0 %v352, 127
    %v400 = vpop.permute.xlu0 %399
    %401 = vrot.lane.b32.xlu0 %v353, 127
    %v402 = vpop.permute.xlu0 %401
    %403 = vrot.lane.b32.xlu0 %v354, 127
    %v404 = vpop.permute.xlu0 %403
    %405 = vrot.lane.b32.xlu0 %v355, 127
    %v406 = vpop.permute.xlu0 %405
    %407 = vrot.lane.b32.xlu0 %v356, 127
    %v408 = vpop.permute.xlu0 %407
    %409 = vrot.lane.b32.xlu0 %v357, 127
    %v410 = vpop.permute.xlu0 %409
    %411 = vrot.lane.b32.xlu0 %v358, 127
    %v412 = vpop.permute.xlu0 %411
    %413 = vrot.lane.b32.xlu0 %v359, 127
    %v414 = vpop.permute.xlu0 %413
    %431 = vrot.lane.b32.xlu0 %v366, 127
    %v432 = vpop.permute.xlu0 %431
    %434 = vmatpush.msra.mxu0 %v414
    %435 = vmatpush.msra.mxu0 %v412
    %436 = vmatpush.msra.mxu0 %v410
    %437 = vmatpush.msra.mxu0 %v408
    %438 = vmatpush.msra.mxu0 %v406
    %439 = vmatpush.msra.mxu0 %v404
    %440 = vmatpush.msra.mxu0 %v402
    %441 = vmatpush.msra.mxu0 %v400
    %442 = vmatpush.msra.mxu0 %v398
    %443 = vmatpush.msra.mxu0 %v396
    %444 = vmatpush.msra.mxu0 %v394
    %445 = vmatpush.msra.mxu0 %v392
    %446 = vmatpush.msra.mxu0 %v390
    %447 = vmatpush.msra.mxu0 %v388
    %448 = vmatpush.msra.mxu0 %v386
    %449 = vmatpush.msra.mxu0 %v384
    %450 = vmatmul.f32.gmra.mxu0 %v262
    %v451 = vpop.f32.mrf.mxu0
    %v452 = vadd.f32 %v432, %v451
    %453 = vdwg.mxu0
    %v454 = vmax.f32 %v452, 0.0
    %v455 = vand.u32 2147483647, %v452
    %v456 = vsub.f32 0.0, %v455
    %v457 = vmul.f32 %v456, 1.442695
    %v458 = vpow.pop %v457
    %v459 = vadd.f32 %v458, 1.0
    %v460 = vlog2.pop %v459
    %v461 = vmul.f32 %v460, 0.6931472
    %v462 = vadd.f32 %v454, %v461
    %v463 = vsub.f32 0.0, %v462
    %vm464 = vcmask 7168
    %465 = vst.msk [vmem:[%s5] sm:$0xff] %vm464, %v463
    %v466 = vsub.f32 %v452, %v462
    %468 = vrot.lane.b32.xlu0 %v466, 1
    %v469 = vpop.permute.xlu0 %468
    %vm471 = vcmask 15368
    %472 = vst.msk [vmem:[%s5] sm:$0xff] %vm471, %v469
    // Predicated region
    $region26: #{tpu_custom_call.1} parent=1 // pred_check
      _
    $region27: #{tpu_custom_call.1} parent=1 // pred_check_branch
      %474 = sbr.rel (0) target = $region29
    $region28: #{tpu_custom_call.1} parent=1 // pred_region
      _
    $region29: #{tpu_custom_call.1} parent=1 // pred_fallthru
      _
    // Predicated region
    $region30: #{tpu_custom_call.1} parent=1 // pred_check
      _
    $region31: #{tpu_custom_call.1} parent=1 // pred_check_branch
      %476 = sbr.rel (0) target = $region33
    $region32: #{tpu_custom_call.1} parent=1 // pred_region
      _
    $region33: #{tpu_custom_call.1} parent=1 // pred_fallthru
      _
    %477 = vsyncpa [#allocation3], 1

</llo_original>
